<compile_context>
chip_gen: v7x
topology: tpu7x:2x2x1
jax: 0.10.0
libtpu: 0.0.40
codegen_flags: <defaults>
</compile_context>

<pallas_src>
import jax
import jax.numpy as jnp
from jax.experimental import pallas as pl
from jax.experimental.pallas import tpu as pltpu


def _round_up(x, m):
    return ((x + m - 1) // m) * m


# ---------------------------------------------------------------------------
# Fused single-pass kernel: one batch element per grid step.
# ---------------------------------------------------------------------------
def _make_fused_kernel(HW, HWp):
    inv_hw = 1.0 / HW

    def kernel(x_ref, w1_ref, w2_ref, o_ref):
        # x_ref: (1, C, HWp).  Pool in f32; keepdims keeps C on the sublane
        # axis so the gate broadcast below needs no relayout.
        xf = x_ref[...].astype(jnp.float32)
        if HW != HWp:
            idx = jax.lax.broadcasted_iota(jnp.int32, xf.shape, 2)
            valid = idx < HW
            xsum = jnp.sum(jnp.where(valid, xf, 0.0), axis=-1, keepdims=True)
            xmax = jnp.max(jnp.where(valid, xf, -jnp.inf), axis=-1, keepdims=True)
        else:
            xsum = jnp.sum(xf, axis=-1, keepdims=True)
            xmax = jnp.max(xf, axis=-1, keepdims=True)

        avg = xsum[0] * inv_hw                            # (C, 1)
        mx = xmax[0]                                      # (C, 1)
        pooled = jnp.concatenate([avg, mx], axis=-1)      # (C, 2)

        w1 = w1_ref[...].astype(jnp.float32)              # (Cr, C)
        w2 = w2_ref[...].astype(jnp.float32)              # (C, Cr)
        # Both branches fused into one pair of matmuls (no weight transpose).
        h = jnp.maximum(
            jnp.dot(w1, pooled, preferred_element_type=jnp.float32), 0.0)  # (Cr, 2)
        y = jnp.dot(w2, h, preferred_element_type=jnp.float32)             # (C, 2)
        gate = jax.nn.sigmoid(y[:, 0:1] + y[:, 1:2])                        # (C, 1)

        # Re-read x from VMEM for the gated multiply (the f32 copy above is
        # dead by now); multiply stays in x's dtype.
        o_ref[...] = (gate[None].astype(x_ref.dtype) * x_ref[...]).astype(o_ref.dtype)

    return kernel


# ---------------------------------------------------------------------------
# Tiled two-pass path (large H*W or B < 2):
#   pass 1: pooling + MLP -> per-channel gates (B, C, 1)
#   pass 2: lane-dense streaming gated multiply
# ---------------------------------------------------------------------------
def _make_pool_mlp_kernel(HW, hw_tile, masked):
    inv_hw = 1.0 / HW

    def kernel(x_ref, w1_ref, w2_ref, g_ref, sum_acc, max_acc):
        t = pl.program_id(1)

        @pl.when(t == 0)
        def _():
            sum_acc[...] = jnp.zeros(sum_acc.shape, sum_acc.dtype)
            max_acc[...] = jnp.full(max_acc.shape, -jnp.inf, max_acc.dtype)

        xf = x_ref[...].astype(jnp.float32)               # (1, C, hw_tile)
        if masked:
            idx = t * hw_tile + jax.lax.broadcasted_iota(jnp.int32, xf.shape, 2)
            valid = idx < HW
            part_sum = jnp.sum(jnp.where(valid, xf, 0.0), axis=-1, keepdims=True)
            part_max = jnp.max(jnp.where(valid, xf, -jnp.inf), axis=-1, keepdims=True)
        else:
            part_sum = jnp.sum(xf, axis=-1, keepdims=True)
            part_max = jnp.max(xf, axis=-1, keepdims=True)
        sum_acc[...] += part_sum[0]
        max_acc[...] = jnp.maximum(max_acc[...], part_max[0])

        @pl.when(t == pl.num_programs(1) - 1)
        def _():
            avg = sum_acc[...] * inv_hw                                   # (C, 1)
            pooled = jnp.concatenate([avg, max_acc[...]], axis=-1)        # (C, 2)
            w1 = w1_ref[...].astype(jnp.float32)
            w2 = w2_ref[...].astype(jnp.float32)
            h = jnp.maximum(
                jnp.dot(w1, pooled, preferred_element_type=jnp.float32), 0.0)
            y = jnp.dot(w2, h, preferred_element_type=jnp.float32)        # (C, 2)
            gate = jax.nn.sigmoid(y[:, 0:1] + y[:, 1:2])                  # (C, 1)
            g_ref[...] = gate[None]                                       # (1, C, 1)

    return kernel


def _gated_multiply_kernel(g_ref, x_ref, o_ref):
    # g_ref: (1, C, 1) f32; x_ref / o_ref: (1, C, hw_tile)
    o_ref[...] = (g_ref[...].astype(x_ref.dtype) * x_ref[...]).astype(o_ref.dtype)


# ---------------------------------------------------------------------------
# Wrapper
# ---------------------------------------------------------------------------
def channel_attention(feat, w1, w2, *, force_tiled=False):
    """feat: (B, C, H, W); w1: (Cr, C) fc1 weight; w2: (C, Cr) fc2 weight."""
    B, C, H, W = feat.shape
    HW = H * W
    Cr = w1.shape[0]
    itemsize = jnp.dtype(feat.dtype).itemsize
    x = feat.reshape(B, C, HW)
    w_bytes = 2 * (w1.size + w2.size) * 4

    fused_hwp = _round_up(HW, 128)
    fused_block = C * fused_hwp * itemsize
    # Fused block is double-buffered for input and output (~4x); keep it well
    # under v7x's 64 MiB VMEM.  Use the tiled path when B < 2 so the streaming
    # multiply still feeds both TensorCores on v7x.
    use_fused = (not force_tiled) and fused_block <= (4 << 20) and B >= 2

    if use_fused:
        HWp = fused_hwp
        if HWp != HW:
            x = jnp.pad(x, ((0, 0), (0, 0), (0, HWp - HW)))
        vmem_limit = int(max(4 * fused_block + w_bytes + (2 << 20), 16 << 20))
        out = pl.pallas_call(
            _make_fused_kernel(HW, HWp),
            out_shape=jax.ShapeDtypeStruct((B, C, HWp), feat.dtype),
            grid_spec=pltpu.PrefetchScalarGridSpec(
                num_scalar_prefetch=0,
                grid=(B,),
                in_specs=[
                    pl.BlockSpec((1, C, HWp), lambda b: (b, 0, 0)),
                    pl.BlockSpec((Cr, C), lambda b: (0, 0)),
                    pl.BlockSpec((C, Cr), lambda b: (0, 0)),
                ],
                out_specs=pl.BlockSpec((1, C, HWp), lambda b: (b, 0, 0)),
            ),
            compiler_params=pltpu.CompilerParams(
                dimension_semantics=("parallel",),
                vmem_limit_bytes=vmem_limit),
        )(x, w1, w2)
    else:
        # Lane-dense spatial tile: multiple of 128, ~2 MiB per block.
        budget = 2 << 20
        hw_tile = (budget // (C * itemsize)) // 128 * 128
        hw_tile = int(max(128, min(hw_tile, 4096)))
        hw_tile = min(hw_tile, _round_up(HW, 128))
        HWp = _round_up(HW, hw_tile)
        n_hw = HWp // hw_tile
        if HWp != HW:
            x = jnp.pad(x, ((0, 0), (0, 0), (0, HWp - HW)))
        block_bytes = C * hw_tile * itemsize
        vmem_limit = int(max(4 * block_bytes + w_bytes + (2 << 20), 16 << 20))
        masked = HWp != HW

        gates = pl.pallas_call(
            _make_pool_mlp_kernel(HW, hw_tile, masked),
            out_shape=jax.ShapeDtypeStruct((B, C, 1), jnp.float32),
            grid_spec=pltpu.PrefetchScalarGridSpec(
                num_scalar_prefetch=0,
                grid=(B, n_hw),
                in_specs=[
                    pl.BlockSpec((1, C, hw_tile), lambda b, t: (b, 0, t)),
                    pl.BlockSpec((Cr, C), lambda b, t: (0, 0)),
                    pl.BlockSpec((C, Cr), lambda b, t: (0, 0)),
                ],
                out_specs=pl.BlockSpec((1, C, 1), lambda b, t: (b, 0, 0)),
                scratch_shapes=[pltpu.VMEM((C, 1), jnp.float32),
                                pltpu.VMEM((C, 1), jnp.float32)],
            ),
            compiler_params=pltpu.CompilerParams(
                dimension_semantics=("parallel", "arbitrary"),
                vmem_limit_bytes=vmem_limit),
        )(x, w1, w2)

        out = pl.pallas_call(
            _gated_multiply_kernel,
            out_shape=jax.ShapeDtypeStruct((B, C, HWp), feat.dtype),
            grid_spec=pltpu.PrefetchScalarGridSpec(
                num_scalar_prefetch=0,
                grid=(B, n_hw),
                in_specs=[
                    pl.BlockSpec((1, C, 1), lambda b, t: (b, 0, 0)),
                    pl.BlockSpec((1, C, hw_tile), lambda b, t: (b, 0, t)),
                ],
                out_specs=pl.BlockSpec((1, C, hw_tile), lambda b, t: (b, 0, t)),
            ),
            compiler_params=pltpu.CompilerParams(
                dimension_semantics=("parallel", "parallel"),
                vmem_limit_bytes=vmem_limit),
        )(gates, x)

    if HWp != HW:
        out = out[:, :, :HW]
    return out.reshape(B, C, H, W)


def _reference(feat, w1, w2):
    # Pure-JAX reference matching the PyTorch forward.
    avg = jnp.mean(feat, axis=(2, 3))                        # (B, C)
    mx = jnp.max(feat, axis=(2, 3))                          # (B, C)

    def mlp(v):
        h = jnp.maximum(v @ w1.T, 0.0)
        return h @ w2.T

    gate = jax.nn.sigmoid(mlp(avg) + mlp(mx))                # (B, C)
    return gate[:, :, None, None] * feat


if __name__ == "__main__":
    # Small shapes consistent with the module: B=2, C=4, H=W=16, ratio=4.
    B, C, H, W = 2, 4, 16, 16
    ratio = 4
    Cr = max(1, C // ratio)

    key = jax.random.PRNGKey(0)
    k_feat, k_w1, k_w2 = jax.random.split(key, 3)

    feat = jax.random.normal(k_feat, (B, C, H, W), dtype=jnp.float32)
    # Deterministic synthetic 1x1-conv weights (fc1: C->Cr, fc2: Cr->C).
    w1 = jax.random.normal(k_w1, (Cr, C), dtype=jnp.float32) * 0.5
    w2 = jax.random.normal(k_w2, (C, Cr), dtype=jnp.float32) * 0.5

    ref = _reference(feat, w1, w2)

    # Fused single-pass path.
    out_fused = jax.block_until_ready(channel_attention(feat, w1, w2))
    assert out_fused.shape == (B, C, H, W)
    assert jnp.allclose(out_fused, ref, atol=1e-5, rtol=1e-5), "fused mismatch"

    # Tiled two-pass path (exercised explicitly so both paths are validated).
    out_tiled = jax.block_until_ready(
        channel_attention(feat, w1, w2, force_tiled=True))
    assert jnp.allclose(out_tiled, ref, atol=1e-5, rtol=1e-5), "tiled mismatch"

    print("KERNEL_OK")
</pallas_src>

<mosaic_0001>
module attributes {stable_mosaic.version = 11 : i64} {
  func.func @kernel(%arg0: i32, %arg1: memref<1x4x256xf32, #tpu.memory_space<vmem>>, %arg2: memref<1x4xf32, #tpu.memory_space<vmem>>, %arg3: memref<4x1xf32, #tpu.memory_space<vmem>>, %arg4: memref<1x4x256xf32, #tpu.memory_space<vmem>>) attributes {dimension_semantics = [#tpu.dimension_semantics<parallel>], iteration_bounds = array<i64: 2>, scalar_prefetch = 0 : i64, scratch_operands = 0 : i64, tpu.core_type = #tpu.core_type<tc>, window_params = [{transform_indices = @transform_0, window_bounds = array<i64: 1, 4, 256>}, {pipeline_mode = #tpu.pipeline_mode<synchronous>, transform_indices = @transform_1, window_bounds = array<i64: 1, 4>}, {pipeline_mode = #tpu.pipeline_mode<synchronous>, transform_indices = @transform_2, window_bounds = array<i64: 4, 1>}, {transform_indices = @transform_3, window_bounds = array<i64: 1, 4, 256>}]} {
    %c0 = arith.constant 0 : index
    %c0_0 = arith.constant 0 : index
    %c0_1 = arith.constant 0 : index
    %0 = vector.load %arg1[%c0, %c0_0, %c0_1] : memref<1x4x256xf32, #tpu.memory_space<vmem>>, vector<1x4x256xf32>
    %cst = arith.constant dense<0.000000e+00> : vector<1x4xf32>
    %1 = vector.multi_reduction <add>, %0, %cst [2] : vector<1x4x256xf32> to vector<1x4xf32>
    %2 = vector.shape_cast %1 : vector<1x4xf32> to vector<1x4x1xf32>
    %cst_2 = arith.constant dense<0xFF800000> : vector<1x4xf32>
    %3 = vector.multi_reduction <maximumf>, %0, %cst_2 [2] : vector<1x4x256xf32> to vector<1x4xf32>
    %4 = vector.shape_cast %3 : vector<1x4xf32> to vector<1x4x1xf32>
    %5 = vector.shape_cast %2 : vector<1x4x1xf32> to vector<4x1xf32>
    %cst_3 = arith.constant 3.906250e-03 : f32
    %6 = vector.broadcast %cst_3 : f32 to vector<4x1xf32>
    %7 = arith.mulf %5, %6 : vector<4x1xf32>
    %8 = vector.shape_cast %4 : vector<1x4x1xf32> to vector<4x1xf32>
    %9 = tpu.concatenate %7, %8 in 1 : vector<4x1xf32>, vector<4x1xf32> -> vector<4x2xf32>
    %c0_4 = arith.constant 0 : index
    %c0_5 = arith.constant 0 : index
    %10 = vector.load %arg2[%c0_4, %c0_5] : memref<1x4xf32, #tpu.memory_space<vmem>>, vector<1x4xf32>
    %c0_6 = arith.constant 0 : index
    %c0_7 = arith.constant 0 : index
    %11 = vector.load %arg3[%c0_6, %c0_7] : memref<4x1xf32, #tpu.memory_space<vmem>>, vector<4x1xf32>
    %cst_8 = arith.constant dense<0.000000e+00> : vector<1x2xf32>
    %12 = tpu.matmul %10, %9, %cst_8 {dimension_numbers = #tpu.dot_dimension_numbers<[1], [0], [0], [1], [0, 0, 1, 1], [], []>} : vector<1x4xf32>, vector<4x2xf32>, vector<1x2xf32> -> vector<1x2xf32>
    %cst_9 = arith.constant 0.000000e+00 : f32
    %13 = vector.broadcast %cst_9 : f32 to vector<1x2xf32>
    %14 = arith.maximumf %12, %13 : vector<1x2xf32>
    %cst_10 = arith.constant dense<0.000000e+00> : vector<4x2xf32>
    %15 = tpu.matmul %11, %14, %cst_10 {dimension_numbers = #tpu.dot_dimension_numbers<[1], [0], [0], [1], [0, 0, 1, 1], [], []>} : vector<4x1xf32>, vector<1x2xf32>, vector<4x2xf32> -> vector<4x2xf32>
    %16 = vector.extract_strided_slice %15 {offsets = [0, 0], sizes = [4, 1], strides = [1, 1]} : vector<4x2xf32> to vector<4x1xf32>
    %17 = vector.extract_strided_slice %15 {offsets = [0, 1], sizes = [4, 1], strides = [1, 1]} : vector<4x2xf32> to vector<4x1xf32>
    %18 = arith.addf %16, %17 : vector<4x1xf32>
    %19 = arith.negf %18 : vector<4x1xf32>
    %20 = math.exp %19 : vector<4x1xf32>
    %cst_11 = arith.constant 1.000000e+00 : f32
    %21 = vector.broadcast %cst_11 : f32 to vector<4x1xf32>
    %22 = arith.addf %21, %20 : vector<4x1xf32>
    %23 = arith.divf %21, %22 : vector<4x1xf32>
    %24 = vector.shape_cast %23 : vector<4x1xf32> to vector<1x4x1xf32>
    %c0_12 = arith.constant 0 : index
    %c0_13 = arith.constant 0 : index
    %c0_14 = arith.constant 0 : index
    %25 = vector.load %arg1[%c0_12, %c0_13, %c0_14] : memref<1x4x256xf32, #tpu.memory_space<vmem>>, vector<1x4x256xf32>
    %26 = vector.broadcast %24 : vector<1x4x1xf32> to vector<1x4x256xf32>
    %27 = arith.mulf %26, %25 : vector<1x4x256xf32>
    %c0_15 = arith.constant 0 : index
    %c0_16 = arith.constant 0 : index
    %c0_17 = arith.constant 0 : index
    %28 = vector.load %arg4[%c0_15, %c0_16, %c0_17] : memref<1x4x256xf32, #tpu.memory_space<vmem>>, vector<1x4x256xf32>
    tpu.vector_store %arg4[%c0_15, %c0_16, %c0_17], %27 {strides = array<i32>} : memref<1x4x256xf32, #tpu.memory_space<vmem>>, vector<1x4x256xf32>,
    return
  }
  func.func @transform_0(%arg0: i32) -> (i32, i32, i32) {
    %c0_i32 = arith.constant 0 : i32
    %c0_i32_0 = arith.constant 0 : i32
    %c0_i32_1 = arith.constant 0 : i32
    return %arg0, %c0_i32, %c0_i32_0 : i32, i32, i32
  }
  func.func @transform_1(%arg0: i32) -> (i32, i32) {
    %c0_i32 = arith.constant 0 : i32
    %c0_i32_0 = arith.constant 0 : i32
    %c0_i32_1 = arith.constant 0 : i32
    return %c0_i32, %c0_i32_0 : i32, i32
  }
  func.func @transform_2(%arg0: i32) -> (i32, i32) {
    %c0_i32 = arith.constant 0 : i32
    %c0_i32_0 = arith.constant 0 : i32
    %c0_i32_1 = arith.constant 0 : i32
    return %c0_i32, %c0_i32_0 : i32, i32
  }
  func.func @transform_3(%arg0: i32) -> (i32, i32, i32) {
    %c0_i32 = arith.constant 0 : i32
    %c0_i32_0 = arith.constant 0 : i32
    %c0_i32_1 = arith.constant 0 : i32
    return %arg0, %c0_i32, %c0_i32_0 : i32, i32, i32
  }
}

</mosaic_0001>

<llo_original>
// kernel: tpu_custom_call.1
$region0: #{tpu_custom_call.1}
  #allocation0 [shape = 'u32[]', space=smem, size = 0x4, offset = 0x4, fixed_abs, tag = 'smem constant byte address 0x4 - core index']
  #allocation1 [shape = 'u32[144,128]{1,0:T(1,128)}', space=vmem, size = 0x12000, scoped, tag = 'internal scratch']
  %s0 = inlined_call_operand.hbm [shape: f32[2,4,256], index: 0, kind: input, shape index: {}]
  %s1 = inlined_call_operand.vmem [shape: f32[1,4], index: 1, kind: input, shape index: {}]
  %s2 = inlined_call_operand.vmem [shape: f32[4,1], index: 2, kind: input, shape index: {}]
  %s3 = inlined_call_operand.hbm [shape: f32[2,4,256], index: 3, kind: output, shape index: {}]
  %s4 = sld [smem:[#allocation0]]
  $region49: #{tpu_custom_call.1} parent=0
    _
  %s6 = ssub.s32 1, %s4
  %s7 = scalar_select 0, %s6, %s4
  $region1: #{tpu_custom_call.1} parent=0
    #allocation2 [shape = 'u8[8192]{0}', space=vmem, size = 0x2000, scoped, tag = 'input window, operand 0']
    #allocation3 [shape = 's32[2]{0}', space=sflag, size = 0x8, scoped, tag = 'scoped memory for tpu_custom_call.1']
    #allocation4 [shape = 's32[2]{0}', space=sflag, size = 0x8, scoped, tag = 'scoped memory for tpu_custom_call.1']
    #allocation5 [shape = 'u8[8192]{0}', space=vmem, size = 0x2000, scoped, tag = 'output window, operand 0']
    %8 = vsyncpa [#allocation3], 0
    %s9 = scalar_lea.sflag [#allocation3], 1
    %10 = vsyncpa %s9, 0
    %11 = vsyncpa [#allocation4], 0
    %s12 = scalar_lea.sflag [#allocation4], 1
    %13 = vsyncpa %s12, 0
    loop: start=0, step=1, limit=4
    $region2: #{tpu_custom_call.1} parent=1 // loop_pre_header
      _
    $region3: #{tpu_custom_call.1} parent=1 // loop_header
      %s15 = sphi 0, %s19
      %p16 = scmp.ge.s32.totalorder %s15, 4
      %s25 = sphi 0, %s27
      %s28 = sphi 0, %s25
      %s29 = sphi 0, %s28
      %s45 = sphi 0, %s29
      %s49 = sphi 0, %s49
      %s51 = sphi 0, %s49
      %s52 = sphi 0, %s51
      %s66 = sphi 0, %s52
      %s70 = sphi 0, %s70
      %s72 = sphi 0, %s70
      %s73 = sphi 0, %s72
      %s87 = sphi 0, %s73
      %s93 = sphi 0, %s95
      %s96 = sphi 0, %s93
      %s97 = sphi 0, %s96
      %s113 = sphi 0, %s97
    $region4: #{tpu_custom_call.1} parent=1 // loop_header_branch
      %18 = sbr.rel (%p16) target = $region8
    $region5: #{tpu_custom_call.1} parent=1 // loop_body
      %s20 = ssub.s32 %s15, 1
      %s21 = ssub.s32 %s15, 2
      %s22 = sadd.s32 %s15, 1
      %s23 = ssub.s32 %s15, %s22
      %p24 = scmp.eq.s32.totalorder %s23, 0
      %s26 = sadd.s32 %s25, 1
      %s27 = scalar_select %p24, %s25, %s26
      %p30 = pneg %p24
      %p31 = scmp.eq.s32.totalorder %s15, 1
      %p32 = por %p30, %p31
      %p33 = scmp.ne.s32.totalorder %s25, %s28
      %p34 = scmp.eq.s32.totalorder %s15, 0
      %p35 = por %p33, %p34
      %p36 = scmp.ne.s32.totalorder %s25, %s28
      %p37 = scmp.eq.s32.totalorder %s20, 1
      %p38 = por %p36, %p37
      %p39 = scmp.ne.s32.totalorder %s28, %s29
      %p40 = scmp.eq.s32.totalorder %s20, 0
      %p41 = por %p39, %p40
      %p42 = scmp.ne.s32.totalorder %s28, %s29
      %p43 = scmp.eq.s32.totalorder %s21, 1
      %p44 = por %p42, %p43
      %p46 = scmp.ne.s32.totalorder %s29, %s45
      %p47 = scmp.eq.s32.totalorder %s21, 0
      %p48 = por %p46, %p47
      %s50 = sadd.s32 %s49, 1
      %p53 = scmp.eq.s32.totalorder %s15, 1
      %p54 = scmp.ne.s32.totalorder %s49, %s51
      %p55 = scmp.eq.s32.totalorder %s15, 0
      %p56 = por %p54, %p55
      %p57 = scmp.ne.s32.totalorder %s49, %s51
      %p58 = scmp.eq.s32.totalorder %s20, 1
      %p59 = por %p57, %p58
      %p60 = scmp.ne.s32.totalorder %s51, %s52
      %p61 = scmp.eq.s32.totalorder %s20, 0
      %p62 = por %p60, %p61
      %p63 = scmp.ne.s32.totalorder %s51, %s52
      %p64 = scmp.eq.s32.totalorder %s21, 1
      %p65 = por %p63, %p64
      %p67 = scmp.ne.s32.totalorder %s52, %s66
      %p68 = scmp.eq.s32.totalorder %s21, 0
      %p69 = por %p67, %p68
      %s71 = sadd.s32 %s70, 1
      %p74 = scmp.eq.s32.totalorder %s15, 1
      %p75 = scmp.ne.s32.totalorder %s70, %s72
      %p76 = scmp.eq.s32.totalorder %s15, 0
      %p77 = por %p75, %p76
      %p78 = scmp.ne.s32.totalorder %s70, %s72
      %p79 = scmp.eq.s32.totalorder %s20, 1
      %p80 = por %p78, %p79
      %p81 = scmp.ne.s32.totalorder %s72, %s73
      %p82 = scmp.eq.s32.totalorder %s20, 0
      %p83 = por %p81, %p82
      %p84 = scmp.ne.s32.totalorder %s72, %s73
      %p85 = scmp.eq.s32.totalorder %s21, 1
      %p86 = por %p84, %p85
      %p88 = scmp.ne.s32.totalorder %s73, %s87
      %p89 = scmp.eq.s32.totalorder %s21, 0
      %p90 = por %p88, %p89
      %s91 = ssub.s32 %s15, %s22
      %p92 = scmp.eq.s32.totalorder %s91, 0
      %s94 = sadd.s32 %s93, 1
      %s95 = scalar_select %p92, %s93, %s94
      %p98 = pneg %p92
      %p99 = scmp.eq.s32.totalorder %s15, 1
      %p100 = por %p98, %p99
      %p101 = scmp.ne.s32.totalorder %s93, %s96
      %p102 = scmp.eq.s32.totalorder %s15, 0
      %p103 = por %p101, %p102
      %p104 = scmp.ne.s32.totalorder %s93, %s96
      %p105 = scmp.eq.s32.totalorder %s20, 1
      %p106 = por %p104, %p105
      %p107 = scmp.ne.s32.totalorder %s96, %s97
      %p108 = scmp.eq.s32.totalorder %s20, 0
      %p109 = por %p107, %p108
      %p110 = scmp.ne.s32.totalorder %s96, %s97
      %p111 = scmp.eq.s32.totalorder %s21, 1
      %p112 = por %p110, %p111
      %p114 = scmp.ne.s32.totalorder %s97, %s113
      %p115 = scmp.eq.s32.totalorder %s21, 0
      %p116 = por %p114, %p115
      %p117 = scmp.le.s32.totalorder 1, %s15
      %p118 = scmp.lt.s32.totalorder %s15, 3
      %p119 = pnand %p117, %p118
      %p120 = pneg %p119
      // Predicated region
      $region9: #{tpu_custom_call.1} parent=5 // pred_check
        _
      $region10: #{tpu_custom_call.1} parent=5 // pred_check_branch
        %122 = sbr.rel (%p119) target = $region12
      $region11: #{tpu_custom_call.1} parent=5 // pred_region
        %s123 = ssub.s32 %s15, 1
        // Predicated region
        $region13: #{tpu_custom_call.1} parent=11 // pred_check
          %p124 = pneg %p62
        $region14: #{tpu_custom_call.1} parent=11 // pred_check_branch
          %126 = sbr.rel (%p124) target = $region16
        $region15: #{tpu_custom_call.1} parent=11 // pred_region
          _
        $region16: #{tpu_custom_call.1} parent=11 // pred_fallthru
          _
        // Predicated region
        $region17: #{tpu_custom_call.1} parent=11 // pred_check
          %p127 = pneg %p83
        $region18: #{tpu_custom_call.1} parent=11 // pred_check_branch
          %129 = sbr.rel (%p127) target = $region20
        $region19: #{tpu_custom_call.1} parent=11 // pred_region
          _
        $region20: #{tpu_custom_call.1} parent=11 // pred_fallthru
          _
      $region12: #{tpu_custom_call.1} parent=5 // pred_fallthru
        _
      %p130 = scmp.lt.s32.totalorder %s15, 2
      // Predicated region
      $region21: #{tpu_custom_call.1} parent=5 // pred_check
        %p131 = pneg %p130
      $region22: #{tpu_custom_call.1} parent=5 // pred_check_branch
        %133 = sbr.rel (%p131) target = $region24
      $region23: #{tpu_custom_call.1} parent=5 // pred_region
        // Predicated region
        $region25: #{tpu_custom_call.1} parent=23 // pred_check
          %p134 = pneg %p35
        $region26: #{tpu_custom_call.1} parent=23 // pred_check_branch
          %136 = sbr.rel (%p134) target = $region28
        $region27: #{tpu_custom_call.1} parent=23 // pred_region
          %s137 = sand.u32 %s25, 1
          %s138 = scalar_lea.sflag [#allocation3], %s137
          %s139 = sand.u32 %s25, 1
          %s140 = smul.addr %s139, 8
          %s141 = scalar_lea.vmem [#allocation2], %s140
          %s143 = ssub.s32 128, 128
          %144 = vsyncadd %s138, %s143
          %s145 = smul.addr %s15, 2
          %s146 = smul.addr %s145, 64
          %s147 = scalar_lea.hbm %s0, %s146
          %s149 = sshll.u32 %s141, 4
          %s150 = int_to_ptr.vmem [resolvable:$true] %s149
          %152 = dma.hbm_to_vmem [thread:$0]  %s147, 128, %s150, %s138
        $region28: #{tpu_custom_call.1} parent=23 // pred_fallthru
          _
      $region24: #{tpu_custom_call.1} parent=5 // pred_fallthru
        _
      %p153 = scmp.le.s32.totalorder 1, %s15
      %p154 = scmp.lt.s32.totalorder %s15, 3
      %p155 = pnand %p153, %p154
      %p156 = pneg %p155
      // Predicated region
      $region29: #{tpu_custom_call.1} parent=5 // pred_check
        _
      $region30: #{tpu_custom_call.1} parent=5 // pred_check_branch
        %158 = sbr.rel (%p155) target = $region32
      $region31: #{tpu_custom_call.1} parent=5 // pred_region
        %s159 = ssub.s32 %s15, 1
        %s160 = sand.u32 %s28, 1
        %s161 = scalar_lea.sflag [#allocation3], %s160
        %s162 = sand.u32 %s28, 1
        %s163 = smul.addr %s162, 8
        %s164 = scalar_lea.vmem [#allocation2], %s163
        // Predicated region
        $region33: #{tpu_custom_call.1} parent=31 // pred_check
          %p165 = pneg %p41
        $region34: #{tpu_custom_call.1} parent=31 // pred_check_branch
          %167 = sbr.rel (%p165) target = $region36
        $region35: #{tpu_custom_call.1} parent=31 // pred_region
          %168 = dma.done %s161, 128
        $region36: #{tpu_custom_call.1} parent=31 // pred_fallthru
          _
        %s169 = sand.u32 %s28, 1
        %s170 = scalar_lea.sflag [#allocation3], %s169
        %s171 = sand.u32 %s28, 1
        %s172 = smul.addr %s171, 8
        %s173 = scalar_lea.vmem [#allocation2], %s172
        %p174 = pneg %p41
        %p175 = pneg %p38
        %p176 = pneg %p62
        %p177 = pneg %p59
        %p178 = pneg %p83
        %p179 = pneg %p80
        %p180 = pneg %p109
        %p181 = pneg %p106
        %s182 = sand.u32 %s96, 1
        %s183 = scalar_lea.sflag [#allocation4], %s182
        %s184 = sand.u32 %s96, 1
        %s185 = smul.addr %s184, 8
        %s186 = scalar_lea.vmem [#allocation5], %s185
        %v187 = vld [vmem:[%s164] sm:$0xff]
        %v189 = vcombine.high %v187, %v187
        %vm191 = vcmask 1043456
        %v192 = vsel %vm191, %v187, 0.0
        %v193 = vsel %vm191, %v189, 0.0
        %v194 = vadd.f32 %v192, %v193
        %195 = vadd.xlane.f32.xlu0 %v194
        %v196 = vpop.xlane.xlu0 %195
        %v197 = vsel %vm191, %v187, -inf
        %v198 = vsel %vm191, %v189, -inf
        %v199 = vmax.f32 %v197, %v198
        %200 = vmax.xlane.f32.xlu0 %v199
        %v201 = vpop.xlane.xlu0 %200
        %v202 = vmul.f32 %v196, 0.00390625
        %vm203 = vcmask 7168
        %v204 = vsel %vm203, %v202, %v201
        %v205 = vld [vmem:[%s1] sm:$0x1]
        %v206 = vld [vmem:[%s2] sm:$0xf]
        %vm207 = vcmask 31744
        %v209 = vsel %vm207, %v205, 0
        %v212 = vsel %vm191, %v204, 0
        %214 = vmatprep.subr.mxu0 0.0
        %215 = vmatpush1.msra.mxu0 %v212
        %216 = vmatprep.subr.mxu0 0.0
        %217 = vmatpush1.msra.mxu0 0.0
        %218 = vmatprep.subr.mxu0 0.0
        %219 = vmatpush1.msra.mxu0 0.0
        %220 = vmatprep.subr.mxu0 0.0
        %221 = vmatpush1.msra.mxu0 0.0
        %222 = vmatprep.subr.mxu0 0.0
        %223 = vmatpush1.msra.mxu0 0.0
        %224 = vmatprep.subr.mxu0 0.0
        %225 = vmatpush1.msra.mxu0 0.0
        %226 = vmatprep.subr.mxu0 0.0
        %227 = vmatpush1.msra.mxu0 0.0
        %228 = vmatprep.subr.mxu0 0.0
        %229 = vmatpush1.msra.mxu0 0.0
        %230 = vmatprep.subr.mxu0 0.0
        %231 = vmatpush1.msra.mxu0 0.0
        %232 = vmatprep.subr.mxu0 0.0
        %233 = vmatpush1.msra.mxu0 0.0
        %234 = vmatprep.subr.mxu0 0.0
        %235 = vmatpush1.msra.mxu0 0.0
        %236 = vmatprep.subr.mxu0 0.0
        %237 = vmatpush1.msra.mxu0 0.0
        %238 = vmatprep.subr.mxu0 0.0
        %239 = vmatpush1.msra.mxu0 0.0
        %240 = vmatprep.subr.mxu0 0.0
        %241 = vmatpush1.msra.mxu0 0.0
        %242 = vmatprep.subr.mxu0 0.0
        %243 = vmatpush1.msra.mxu0 0.0
        %244 = vmatprep.subr.mxu0 0.0
        %245 = vmatpush1.msra.mxu0 0.0
        %246 = vmatprep.subr.mxu0 0.0
        %247 = vmatpush1.msra.mxu0 0.0
        %248 = vmatprep.subr.mxu0 0.0
        %249 = vmatpush1.msra.mxu0 0.0
        %250 = vmatprep.subr.mxu0 0.0
        %251 = vmatpush1.msra.mxu0 0.0
        %252 = vmatprep.subr.mxu0 0.0
        %253 = vmatpush1.msra.mxu0 0.0
        %254 = vmatprep.subr.mxu0 0.0
        %255 = vmatpush1.msra.mxu0 0.0
        %256 = vmatprep.subr.mxu0 0.0
        %257 = vmatpush1.msra.mxu0 0.0
        %258 = vmatprep.subr.mxu0 0.0
        %259 = vmatpush1.msra.mxu0 0.0
        %260 = vmatprep.subr.mxu0 0.0
        %261 = vmatpush1.msra.mxu0 0.0
        %262 = vmatprep.subr.mxu0 0.0
        %263 = vmatpush1.msra.mxu0 0.0
        %264 = vmatprep.subr.mxu0 0.0
        %265 = vmatpush1.msra.mxu0 0.0
        %266 = vmatprep.subr.mxu0 0.0
        %267 = vmatpush1.msra.mxu0 0.0
        %268 = vmatprep.subr.mxu0 0.0
        %269 = vmatpush1.msra.mxu0 0.0
        %270 = vmatprep.subr.mxu0 0.0
        %271 = vmatpush1.msra.mxu0 0.0
        %272 = vmatprep.subr.mxu0 0.0
        %273 = vmatpush1.msra.mxu0 0.0
        %274 = vmatprep.subr.mxu0 0.0
        %275 = vmatpush1.msra.mxu0 0.0
        %276 = vmatprep.subr.mxu0 0.0
        %277 = vmatpush1.msra.mxu0 0.0
        %278 = vmatprep.mubr.f32.mxu0 0.0
        %279 = vmatmul.mubr.f32.gmra.mrb[0].mxu0 %v209
        %v280 = vpop.f32.mrb[0].mxu0
        %v281 = vadd.f32 0.0, %v280
        %v282 = vpop.f32.mrb[0].mxu0
        %283 = vdwg.mxu0
        %v284 = vmax.f32 %v281, 0.0
        %v286 = vsel %vm203, %v206, 0
        %vm288 = vcmask 1040384
        %v290 = vsel %vm288, %v284, 0
        %292 = vmatprep.subr.mxu0 0.0
        %293 = vmatpush1.msra.mxu0 %v290
        %294 = vmatprep.subr.mxu0 0.0
        %295 = vmatpush1.msra.mxu0 0.0
        %296 = vmatprep.subr.mxu0 0.0
        %297 = vmatpush1.msra.mxu0 0.0
        %298 = vmatprep.subr.mxu0 0.0
        %299 = vmatpush1.msra.mxu0 0.0
        %300 = vmatprep.subr.mxu0 0.0
        %301 = vmatpush1.msra.mxu0 0.0
        %302 = vmatprep.subr.mxu0 0.0
        %303 = vmatpush1.msra.mxu0 0.0
        %304 = vmatprep.subr.mxu0 0.0
        %305 = vmatpush1.msra.mxu0 0.0
        %306 = vmatprep.subr.mxu0 0.0
        %307 = vmatpush1.msra.mxu0 0.0
        %308 = vmatprep.subr.mxu0 0.0
        %309 = vmatpush1.msra.mxu0 0.0
        %310 = vmatprep.subr.mxu0 0.0
        %311 = vmatpush1.msra.mxu0 0.0
        %312 = vmatprep.subr.mxu0 0.0
        %313 = vmatpush1.msra.mxu0 0.0
        %314 = vmatprep.subr.mxu0 0.0
        %315 = vmatpush1.msra.mxu0 0.0
        %316 = vmatprep.subr.mxu0 0.0
        %317 = vmatpush1.msra.mxu0 0.0
        %318 = vmatprep.subr.mxu0 0.0
        %319 = vmatpush1.msra.mxu0 0.0
        %320 = vmatprep.subr.mxu0 0.0
        %321 = vmatpush1.msra.mxu0 0.0
        %322 = vmatprep.subr.mxu0 0.0
        %323 = vmatpush1.msra.mxu0 0.0
        %324 = vmatprep.subr.mxu0 0.0
        %325 = vmatpush1.msra.mxu0 0.0
        %326 = vmatprep.subr.mxu0 0.0
        %327 = vmatpush1.msra.mxu0 0.0
        %328 = vmatprep.subr.mxu0 0.0
        %329 = vmatpush1.msra.mxu0 0.0
        %330 = vmatprep.subr.mxu0 0.0
        %331 = vmatpush1.msra.mxu0 0.0
        %332 = vmatprep.subr.mxu0 0.0
        %333 = vmatpush1.msra.mxu0 0.0
        %334 = vmatprep.subr.mxu0 0.0
        %335 = vmatpush1.msra.mxu0 0.0
        %336 = vmatprep.subr.mxu0 0.0
        %337 = vmatpush1.msra.mxu0 0.0
        %338 = vmatprep.subr.mxu0 0.0
        %339 = vmatpush1.msra.mxu0 0.0
        %340 = vmatprep.subr.mxu0 0.0
        %341 = vmatpush1.msra.mxu0 0.0
        %342 = vmatprep.subr.mxu0 0.0
        %343 = vmatpush1.msra.mxu0 0.0
        %344 = vmatprep.subr.mxu0 0.0
        %345 = vmatpush1.msra.mxu0 0.0
        %346 = vmatprep.subr.mxu0 0.0
        %347 = vmatpush1.msra.mxu0 0.0
        %348 = vmatprep.subr.mxu0 0.0
        %349 = vmatpush1.msra.mxu0 0.0
        %350 = vmatprep.subr.mxu0 0.0
        %351 = vmatpush1.msra.mxu0 0.0
        %352 = vmatprep.subr.mxu0 0.0
        %353 = vmatpush1.msra.mxu0 0.0
        %354 = vmatprep.subr.mxu0 0.0
        %355 = vmatpush1.msra.mxu0 0.0
        %356 = vmatprep.mubr.f32.mxu0 0.0
        %357 = vmatmul.mubr.f32.gmra.mrb[0].mxu0 %v286
        %v358 = vpop.f32.mrb[0].mxu0
        %v359 = vadd.f32 0.0, %v358
        %v360 = vpop.f32.mrb[0].mxu0
        %361 = vdwg.mxu0
        %363 = vrot.lane.b32.xlu0 %v359, 127
        %v364 = vpop.permute.xlu0 %363
        %v366 = vadd.f32 %v359, %v364
        %v367 = vxor.u32 %v366, 2147483648
        %v368 = vmul.f32 %v367, 1.442695
        %v369 = vpow.pop %v368
        %v370 = vadd.f32 %v369, 1.0
        %v371 = vrcp.pop %v370
        %v372 = vmul.f32 1.0, %v371
        %374 = vset.pattern.permute.xlu0 0
        %375 = vperm.xlu0 %374, %v372
        %v376 = vpop.permute.xlu0 %375
        %v378 = vmul.f32 %v376, %v187
        %v379 = vmul.f32 %v376, %v189
        %v382 = vcombine.low %v378, %v379
        %384 = vst [vmem:[%s186] sm:$0xff] %v382
        %s385 = sand.u32 %s96, 1
        %s386 = scalar_lea.sflag [#allocation4], %s385
        %s387 = sand.u32 %s96, 1
        %s388 = smul.addr %s387, 8
        %s389 = scalar_lea.vmem [#allocation5], %s388
        // Predicated region
        $region37: #{tpu_custom_call.1} parent=31 // pred_check
          %p390 = pneg %p106
        $region38: #{tpu_custom_call.1} parent=31 // pred_check_branch
          %392 = sbr.rel (%p390) target = $region40
        $region39: #{tpu_custom_call.1} parent=31 // pred_region
          %s394 = ssub.s32 128, 128
          %395 = vsyncadd %s386, %s394
          %s396 = smul.addr %s20, 2
          %s397 = smul.addr %s396, 64
          %s398 = scalar_lea.hbm %s3, %s397
          %s400 = sshll.u32 %s389, 4
          %s401 = int_to_ptr.vmem [resolvable:$true] %s400
          %403 = dma.vmem_to_hbm [thread:$0]  %s401, 128, %s398, %s386
        $region40: #{tpu_custom_call.1} parent=31 // pred_fallthru
          _
      $region32: #{tpu_custom_call.1} parent=5 // pred_fallthru
        _
      %p404 = scmp.le.s32.totalorder 2, %s15
      // Predicated region
      $region41: #{tpu_custom_call.1} parent=5 // pred_check
        %p405 = pneg %p404
      $region42: #{tpu_custom_call.1} parent=5 // pred_check_branch
        %407 = sbr.rel (%p405) target = $region44
      $region43: #{tpu_custom_call.1} parent=5 // pred_region
        %s408 = ssub.s32 %s15, 2
        // Predicated region
        $region45: #{tpu_custom_call.1} parent=43 // pred_check
          %p409 = pneg %p112
        $region46: #{tpu_custom_call.1} parent=43 // pred_check_branch
          %411 = sbr.rel (%p409) target = $region48
        $region47: #{tpu_custom_call.1} parent=43 // pred_region
          %s412 = sand.u32 %s97, 1
          %s413 = scalar_lea.sflag [#allocation4], %s412
          %s414 = sand.u32 %s97, 1
          %s415 = smul.addr %s414, 8
          %s416 = scalar_lea.vmem [#allocation5], %s415
          %417 = dma.done %s413, 128
        $region48: #{tpu_custom_call.1} parent=43 // pred_fallthru
          _
      $region44: #{tpu_custom_call.1} parent=5 // pred_fallthru
        _
    $region6: #{tpu_custom_call.1} parent=1 // loop_footer
      %s19 = sadd.s32 1, %s15
    $region7: #{tpu_custom_call.1} parent=1 // loop_footer_branch
      %14 = sbr.rel target = $region3
    $region8: #{tpu_custom_call.1} parent=1 // loop_exit
      _
    %418 = vsyncpa [#allocation3], 1
    %s419 = scalar_lea.sflag [#allocation3], 1
    %420 = vsyncpa %s419, 1
    %421 = vsyncpa [#allocation4], 1
    %s422 = scalar_lea.sflag [#allocation4], 1
    %423 = vsyncpa %s422, 1

</llo_original>
